<compile_context>
chip_gen: v5e
topology: v5e:2x2
jax: 0.10.0
libtpu: 0.0.40
codegen_flags: <defaults>
</compile_context>

<pallas_src>
import functools
import math

import jax
import jax.numpy as jnp
from jax import lax
from jax.experimental import pallas as pl
from jax.experimental.pallas import tpu as pltpu


def _loss_kernel(x_ref, o_ref, acc_ref, *, reg, inv_total, rows, row_tile,
                 total_blocks, has_tail, may_overshoot):
    """grid = (num_chunks ["parallel"], steps ["arbitrary" reduction axis]).

    x_ref  : (row_tile, C) tile of the (rows, C) slab (last block may overhang).
    o_ref  : (8, 128) per-chunk output block; only element [0, 0] carries the partial.
    acc_ref: (8, C) f32 VMEM vreg-shaped partial-sum accumulator (VPU adds only).
    """
    cix = pl.program_id(0)
    step = pl.program_id(1)
    steps = pl.num_programs(1)
    blk = cix * steps + step          # logical global row-block index

    @pl.when(step == 0)
    def _init():
        acc_ref[...] = jnp.zeros_like(acc_ref)

    # transform / norm_foo hooks are identity at the Loss.__init__ defaults.
    y = x_ref[...].astype(jnp.float32)
    rt, c = y.shape

    def _accumulate(v):
        # Fold rows into the vreg-shaped accumulator with elementwise vreg adds;
        # the single cross-lane/sublane reduce happens once per chunk (finalize).
        acc_ref[...] += jnp.sum(v.reshape(rt // 8, 8, c), axis=0)

    if has_tail:
        # Last valid block overhangs the array: mask rows beyond `rows`.
        @pl.when(blk == total_blocks - 1)
        def _tail_block():
            valid = rows - (total_blocks - 1) * row_tile
            ridx = lax.broadcasted_iota(jnp.int32, y.shape, 0)
            _accumulate(jnp.where(ridx < valid, y, 0.0))

        @pl.when(blk < total_blocks - 1)
        def _full_block():
            _accumulate(y)
    elif may_overshoot:
        # Chunking didn't divide evenly: duplicated (clamped) blocks are skipped.
        @pl.when(blk < total_blocks)
        def _full_block():
            _accumulate(y)
    else:
        _accumulate(y)

    @pl.when(step == pl.num_programs(1) - 1)
    def _finalize():
        # Single XLU reduce per chunk, then scale by reg / total_elements.
        partial = (reg * inv_total) * jnp.sum(acc_ref[...])
        r = lax.broadcasted_iota(jnp.int32, o_ref.shape, 0)
        q = lax.broadcasted_iota(jnp.int32, o_ref.shape, 1)
        o_ref[...] = jnp.where((r == 0) & (q == 0), partial, 0.0)


def _default_num_chunks():
    """TensorCores per chip: 2 on v7x, 1 on v5e/v6e."""
    try:
        kind = jax.devices()[0].device_kind.lower()
    except Exception:
        return 1
    return 2 if "v7" in kind else 1


def loss_forward(x_fake, *, reg=1.0, block_bytes=4 << 20, num_chunks=None,
                 min_pallas_bytes=1 << 18):
    """Pallas implementation of Loss.forward: reg * compute(x_fake).mean().

    x_fake: arbitrary-shape float array (e.g. (N, T, D) time-series batch).
    Returns a scalar f32.
    """
    x_fake = jnp.asarray(x_fake)
    total = math.prod(x_fake.shape) if x_fake.ndim else 1
    itemsize = jnp.dtype(x_fake.dtype).itemsize

    # Small-input bypass (also guards total == 0): XLA's fused reduce is as
    # fast as a kernel launch for a few hundred KiB or less.
    if total == 0 or total * itemsize < min_pallas_bytes:
        return (reg * jnp.mean(x_fake.astype(jnp.float32))).astype(jnp.float32)

    # Sublane packing of the *input* dtype: 8 rows (f32), 16 (bf16), 32 (int8/fp8).
    sub = max(8, 32 // max(itemsize, 1))

    # Lane width C: collapse trailing dims (a free reshape for contiguous
    # arrays -- no HBM copy) until >= 128 lanes, without dropping below `sub` rows.
    shape = x_fake.shape
    nd = x_fake.ndim
    C = int(shape[-1]) if nd >= 1 else 1
    i = nd - 2
    while i >= 0 and C < 128 and (total // (C * shape[i])) >= sub:
        C *= int(shape[i])
        i -= 1
    rows = total // C

    if rows < sub:
        # Degenerate layout (fewer rows than one sublane tile) -- not worth a kernel.
        # TODO(synk): could re-factor total into (rows >= sub, smaller C) instead.
        return (reg * jnp.mean(x_fake.astype(jnp.float32))).astype(jnp.float32)

    x2 = x_fake.reshape(rows, C)      # free reshape (bitcast), no padding

    # Row tile: multiple of `sub`, never larger than `rows`, sized from the
    # block byte budget (native dtype bytes -- bf16 blocks carry half the HBM bytes).
    rows_floor = (rows // sub) * sub
    rows_by_budget = max(sub, (block_bytes // max(C * itemsize, 1)) // sub * sub)
    row_tile = int(min(rows_floor, rows_by_budget))

    total_blocks = pl.cdiv(rows, row_tile)
    if num_chunks is None:
        num_chunks = _default_num_chunks()
    num_chunks = max(1, min(int(num_chunks), total_blocks))
    steps = pl.cdiv(total_blocks, num_chunks)
    has_tail = (rows % row_tile) != 0
    may_overshoot = (num_chunks * steps) > total_blocks

    kernel = functools.partial(
        _loss_kernel, reg=float(reg), inv_total=1.0 / float(total),
        rows=rows, row_tile=row_tile, total_blocks=total_blocks,
        has_tail=has_tail, may_overshoot=may_overshoot)

    if may_overshoot:
        # Clamp overshoot blocks onto the last valid block (re-reads a valid
        # window; the kernel skips their accumulation via pl.when).
        def x_index_map(cix, s):
            return (jnp.minimum(cix * steps + s, total_blocks - 1), 0)
    else:
        def x_index_map(cix, s):
            return (cix * steps + s, 0)

    out = pl.pallas_call(
        kernel,
        out_shape=jax.ShapeDtypeStruct((num_chunks * 8, 128), jnp.float32),
        grid_spec=pltpu.PrefetchScalarGridSpec(
            num_scalar_prefetch=0,
            grid=(num_chunks, steps),
            in_specs=[
                # Block last dim == full slab width C (equal-to-array-dim rule),
                # so no lane padding is ever materialized.
                pl.BlockSpec((row_tile, C), x_index_map),
            ],
            # One (8,128) output block per chunk; resident across the inner axis.
            out_specs=pl.BlockSpec((8, 128), lambda cix, s: (cix, 0)),
            scratch_shapes=[pltpu.VMEM((8, C), jnp.float32)],
        ),
        compiler_params=pltpu.CompilerParams(
            # Chunk axis may shard across v7x's two TensorCores; the reduction
            # axis stays "arbitrary" (accumulator carried across it).
            dimension_semantics=("parallel", "arbitrary"),
            # Explicit scoped-VMEM limit: safe on v5e/v6e (128 MiB physical)
            # and v7x (64 MiB physical); leaves room for 8 MiB blocks on v7x.
            vmem_limit_bytes=32 << 20,
        ),
        cost_estimate=pl.CostEstimate(
            flops=total,
            transcendentals=0,
            bytes_accessed=total * itemsize + num_chunks * 8 * 128 * 4,
        ),
    )(x2)

    # Each chunk contributed reg/total * chunk_sum at its block's [0,0] (zeros elsewhere).
    return jnp.sum(out)


if __name__ == "__main__":
    key = jax.random.PRNGKey(0)
    k1, k2 = jax.random.split(key)
    reg = 1.3

    # 1) Small shape from the module's usage (batch=2, seq=8, hidden=32).
    #    Default call takes the small-input bypass; the forced call exercises
    #    the Pallas path with a sub-128 trailing-dim collapse.
    x_small = jax.random.normal(k1, (2, 8, 32), dtype=jnp.float32)
    ref_small = reg * jnp.mean(x_small)
    out_bypass = jax.block_until_ready(loss_forward(x_small, reg=reg))
    out_forced = jax.block_until_ready(
        loss_forward(x_small, reg=reg, min_pallas_bytes=0))
    assert jnp.allclose(out_bypass, ref_small, atol=1e-5, rtol=1e-5), (
        out_bypass, ref_small)
    assert jnp.allclose(out_forced, ref_small, atol=1e-5, rtol=1e-5), (
        out_forced, ref_small)

    # 2) Medium shape: non-divisible row count (in-kernel tail masking), lane
    #    width not a multiple of 128, multi-step streaming; also a forced
    #    2-chunk / small-block variant to exercise chunk overshoot clamping.
    x_med = jax.random.normal(k2, (7, 53, 192), dtype=jnp.float32)
    ref_med = reg * jnp.mean(x_med)
    out_med = jax.block_until_ready(loss_forward(x_med, reg=reg))
    out_med_chunked = jax.block_until_ready(
        loss_forward(x_med, reg=reg, num_chunks=2, block_bytes=64 * 1024))
    assert jnp.allclose(out_med, ref_med, atol=1e-5, rtol=1e-5), (
        out_med, ref_med)
    assert jnp.allclose(out_med_chunked, ref_med, atol=1e-5, rtol=1e-5), (
        out_med_chunked, ref_med)

    print("KERNEL_OK")
</pallas_src>

<mosaic_0001>
module attributes {stable_mosaic.version = 11 : i64} {
  func.func @_loss_kernel(%arg0: i32, %arg1: i32, %arg2: memref<16x32xf32, #tpu.memory_space<vmem>>, %arg3: memref<8x128xf32, #tpu.memory_space<vmem>>, %arg4: memref<8x32xf32, #tpu.memory_space<vmem>>) attributes {dimension_semantics = [#tpu.dimension_semantics<parallel>, #tpu.dimension_semantics<arbitrary>], iteration_bounds = array<i64: 1, 1>, scalar_prefetch = 0 : i64, scratch_operands = 1 : i64, tpu.core_type = #tpu.core_type<tc>, window_params = [{transform_indices = @transform_0, window_bounds = array<i64: 16, 32>}, {transform_indices = @transform_1, window_bounds = array<i64: 8, 128>}]} {
    %c0_i32 = arith.constant 0 : i32
    %0 = arith.cmpi eq, %arg1, %c0_i32 : i32
    %1 = arith.extui %0 : i1 to i32
    %c0_i32_0 = arith.constant 0 : i32
    %2 = arith.cmpi ne, %1, %c0_i32_0 : i32
    scf.if %2 {
      %cst_8 = arith.constant 0.000000e+00 : f32
      %12 = vector.broadcast %cst_8 : f32 to vector<8x32xf32>
      %c0_9 = arith.constant 0 : index
      %c0_10 = arith.constant 0 : index
      %13 = vector.load %arg4[%c0_9, %c0_10] : memref<8x32xf32, #tpu.memory_space<vmem>>, vector<8x32xf32>
      tpu.vector_store %arg4[%c0_9, %c0_10], %12 {strides = array<i32>} : memref<8x32xf32, #tpu.memory_space<vmem>>, vector<8x32xf32>,
    } else {
    }
    %c0 = arith.constant 0 : index
    %c0_1 = arith.constant 0 : index
    %3 = vector.load %arg2[%c0, %c0_1] : memref<16x32xf32, #tpu.memory_space<vmem>>, vector<16x32xf32>
    %c0_2 = arith.constant 0 : index
    %c0_3 = arith.constant 0 : index
    %4 = vector.load %arg4[%c0_2, %c0_3] : memref<8x32xf32, #tpu.memory_space<vmem>>, vector<8x32xf32>
    %5 = vector.shape_cast %3 : vector<16x32xf32> to vector<2x8x32xf32>
    %cst = arith.constant dense<0.000000e+00> : vector<8x32xf32>
    %6 = vector.multi_reduction <add>, %5, %cst [0] : vector<2x8x32xf32> to vector<8x32xf32>
    %7 = arith.addf %4, %6 : vector<8x32xf32>
    %c0_4 = arith.constant 0 : index
    %c0_5 = arith.constant 0 : index
    %8 = vector.load %arg4[%c0_4, %c0_5] : memref<8x32xf32, #tpu.memory_space<vmem>>, vector<8x32xf32>
    tpu.vector_store %arg4[%c0_4, %c0_5], %7 {strides = array<i32>} : memref<8x32xf32, #tpu.memory_space<vmem>>, vector<8x32xf32>,
    %c0_i32_6 = arith.constant 0 : i32
    %9 = arith.cmpi eq, %arg1, %c0_i32_6 : i32
    %10 = arith.extui %9 : i1 to i32
    %c0_i32_7 = arith.constant 0 : i32
    %11 = arith.cmpi ne, %10, %c0_i32_7 : i32
    scf.if %11 {
      %c0_8 = arith.constant 0 : index
      %c0_9 = arith.constant 0 : index
      %12 = vector.load %arg4[%c0_8, %c0_9] : memref<8x32xf32, #tpu.memory_space<vmem>>, vector<8x32xf32>
      %13 = vector.shape_cast %12 : vector<8x32xf32> to vector<1x8x32xf32>
      %cst_10 = arith.constant dense<0.000000e+00> : vector<1xf32>
      %14 = vector.multi_reduction <add>, %13, %cst_10 [1, 2] : vector<1x8x32xf32> to vector<1xf32>
      %15 = vector.shape_cast %14 : vector<1xf32> to vector<1x1x1xf32>
      %16 = vector.extract %15[0, 0, 0] : f32 from vector<1x1x1xf32>
      %cst_11 = arith.constant 0.00253906241 : f32
      %17 = arith.mulf %cst_11, %16 : f32
      %18 = tpu.iota {dimensions = array<i32: 0>} : vector<8x128xi32>
      %19 = tpu.iota {dimensions = array<i32: 1>} : vector<8x128xi32>
      %c0_i32_12 = arith.constant 0 : i32
      %20 = vector.broadcast %c0_i32_12 : i32 to vector<8x128xi32>
      %21 = arith.cmpi eq, %18, %20 : vector<8x128xi32>
      %c0_i32_13 = arith.constant 0 : i32
      %22 = vector.broadcast %c0_i32_13 : i32 to vector<8x128xi32>
      %23 = arith.cmpi eq, %19, %22 : vector<8x128xi32>
      %24 = arith.andi %21, %23 : vector<8x128xi1>
      %cst_14 = arith.constant 0.000000e+00 : f32
      %25 = vector.broadcast %17 : f32 to vector<8x128xf32>
      %26 = vector.broadcast %cst_14 : f32 to vector<8x128xf32>
      %27 = arith.select %24, %25, %26 : vector<8x128xi1>, vector<8x128xf32>
      %c0_15 = arith.constant 0 : index
      %c0_16 = arith.constant 0 : index
      %28 = vector.load %arg3[%c0_15, %c0_16] : memref<8x128xf32, #tpu.memory_space<vmem>>, vector<8x128xf32>
      tpu.vector_store %arg3[%c0_15, %c0_16], %27 {strides = array<i32>} : memref<8x128xf32, #tpu.memory_space<vmem>>, vector<8x128xf32>,
    } else {
    }
    return
  }
  func.func @transform_0(%arg0: i32, %arg1: i32) -> (i32, i32) {
    %c1_i32 = arith.constant 1 : i32
    %0 = arith.muli %arg0, %c1_i32 : i32
    %1 = arith.addi %0, %arg1 : i32
    %c0_i32 = arith.constant 0 : i32
    %c0_i32_0 = arith.constant 0 : i32
    return %1, %c0_i32 : i32, i32
  }
  func.func @transform_1(%arg0: i32, %arg1: i32) -> (i32, i32) {
    %c0_i32 = arith.constant 0 : i32
    %c0_i32_0 = arith.constant 0 : i32
    return %arg0, %c0_i32 : i32, i32
  }
}

</mosaic_0001>

<llo_original>
// kernel: tpu_custom_call.1
$region0: #{tpu_custom_call.1}
  #allocation0 [shape = 'u32[]', space=smem, size = 0x4, offset = 0x4, fixed_abs, tag = 'smem constant byte address 0x4 - core index']
  #allocation1 [shape = 'u32[72,128]{1,0:T(1,128)}', space=vmem, size = 0x9000, scoped, tag = 'internal scratch']
  #allocation2 [shape = 'f32[8,32]{1,0:T(8,128)}', space=vmem, size = 0x1000, scoped, tag = 'scratch operand']
  %s0 = inlined_call_operand.hbm [shape: f32[16,32], index: 0, kind: input, shape index: {}]
  %s1 = inlined_call_operand.hbm [shape: f32[8,128], index: 1, kind: output, shape index: {}]
  %s2 = sld [smem:[#allocation0]]
  $region26: #{tpu_custom_call.1} parent=0
    _
  %s4 = ssub.s32 1, %s2
  %s5 = scalar_select 0, %s4, %s2
  $region1: #{tpu_custom_call.1} parent=0
    #allocation3 [shape = 'u8[8192]{0}', space=vmem, size = 0x2000, scoped, tag = 'input window, operand 0, single buffered']
    #allocation4 [shape = 's32[1]{0}', space=sflag, size = 0x4, scoped, tag = 'scoped memory for tpu_custom_call.1']
    #allocation5 [shape = 's32[1]{0}', space=sflag, size = 0x4, scoped, tag = 'scoped memory for tpu_custom_call.1']
    #allocation6 [shape = 'u8[4096]{0}', space=vmem, size = 0x1000, scoped, tag = 'output window, operand 0, single buffered']
    %6 = vsyncpa [#allocation4], 0
    %7 = vsyncpa [#allocation5], 0
    // Predicated region
    $region2: #{tpu_custom_call.1} parent=1 // pred_check
      _
    $region3: #{tpu_custom_call.1} parent=1 // pred_check_branch
      %9 = sbr.rel (0) target = $region5
    $region4: #{tpu_custom_call.1} parent=1 // pred_region
      %s10 = sadd.s32 0, 0
      %s11 = smul.u32 2, %s10
      %13 = vsyncadd [#allocation4], 0
      %s14 = smul.addr %s11, 8
      %s15 = scalar_lea.hbm %s0, %s14
      %s16 = sshll.u32 %s15, 4
      %s17 = int_to_ptr.hbm [resolvable:$true] %s16
      %s18 = sshll.u32 [#allocation3], 4
      %s19 = int_to_ptr.vmem [resolvable:$true] %s18
      %24 = dma.hbm_to_vmem [thread:$0]  %s17, 256, %s19, [#allocation4], 128, 128, 8
    $region5: #{tpu_custom_call.1} parent=1 // pred_fallthru
      _
    // Predicated region
    $region6: #{tpu_custom_call.1} parent=1 // pred_check
      _
    $region7: #{tpu_custom_call.1} parent=1 // pred_check_branch
      %26 = sbr.rel (0) target = $region9
    $region8: #{tpu_custom_call.1} parent=1 // pred_region
      %28 = dma.done [#allocation4], 256
    $region9: #{tpu_custom_call.1} parent=1 // pred_fallthru
      _
    %s29 = sadd.s32 0, 0
    %s30 = smul.u32 2, %s29
    %p31 = scmp.eq.s32.totalorder 0, 0
    // Predicated region
    $region10: #{tpu_custom_call.1} parent=1 // pred_check
      %p32 = pneg %p31
    $region11: #{tpu_custom_call.1} parent=1 // pred_check_branch
      %34 = sbr.rel (%p32) target = $region13
    $region12: #{tpu_custom_call.1} parent=1 // pred_region
      %vm35 = vcmask 261120
      %36 = vst.msk [vmem:[#allocation2] sm:$0xff] %vm35, 0.0
    $region13: #{tpu_custom_call.1} parent=1 // pred_fallthru
      _
    %v37 = vld [vmem:[#allocation3] sm:$0xff]
    %v38 = vld [vmem:[#allocation3 + $0x8] sm:$0xff]
    %v39 = vld [vmem:[#allocation2] sm:$0xff]
    %vm40 = vcmask 261120
    %v41 = vsel %vm40, %v37, 0.0
    %v42 = vsel %vm40, %v38, 0.0
    %v43 = vadd.f32 %v41, %v42
    %v44 = vadd.f32 %v39, %v43
    %45 = vst.msk [vmem:[#allocation2] sm:$0xff] %vm40, %v44
    // Predicated region
    $region14: #{tpu_custom_call.1} parent=1 // pred_check
      %p46 = pneg %p31
    $region15: #{tpu_custom_call.1} parent=1 // pred_check_branch
      %48 = sbr.rel (%p46) target = $region17
    $region16: #{tpu_custom_call.1} parent=1 // pred_region
      %v49 = vld [vmem:[#allocation2] sm:$0xff]
      %v50 = vsel %vm40, %v49, 0.0
      %51 = vadd.xlane.f32.xlu0 %v50
      %v52 = vpop.xlane.xlu0 %51
      %v53 = vrot.slane %v52, 4
      %v54 = vadd.f32 %v52, %v53
      %v55 = vrot.slane %v54, 2
      %v56 = vadd.f32 %v54, %v55
      %v57 = vrot.slane %v56, 1
      %v58 = vadd.f32 %v56, %v57
      %s59 = vtos %v58
      %s60 = smul.f32 %s59, 0.0025390624
      %v61 = vlaneseq
      %v62 = vshrl.u32 %v61, 7
      %v63 = vlaneseq
      %v64 = vand.u32 %v63, 127
      %vm65 = vcmp.eq.s32.totalorder %v62, 0
      %vm66 = vcmp.eq.s32.totalorder %v64, 0
      %vm67 = vmand %vm65, %vm66
      %v68 = vstv %s60
      %v69 = vsel %vm67, %v68, 0.0
      %70 = vst [vmem:[#allocation6] sm:$0xff] %v69
    $region17: #{tpu_custom_call.1} parent=1 // pred_fallthru
      _
    // Predicated region
    $region18: #{tpu_custom_call.1} parent=1 // pred_check
      _
    $region19: #{tpu_custom_call.1} parent=1 // pred_check_branch
      %72 = sbr.rel (0) target = $region21
    $region20: #{tpu_custom_call.1} parent=1 // pred_region
      %74 = vsyncadd [#allocation5], 0
      %s76 = sshll.u32 [#allocation6], 4
      %s77 = int_to_ptr.vmem [resolvable:$true] %s76
      %s78 = sshll.u32 %s1, 4
      %s79 = int_to_ptr.hbm [resolvable:$true] %s78
      %81 = dma.vmem_to_hbm [thread:$0]  %s77, 128, %s79, [#allocation5]
    $region21: #{tpu_custom_call.1} parent=1 // pred_fallthru
      _
    // Predicated region
    $region22: #{tpu_custom_call.1} parent=1 // pred_check
      _
    $region23: #{tpu_custom_call.1} parent=1 // pred_check_branch
      %83 = sbr.rel (0) target = $region25
    $region24: #{tpu_custom_call.1} parent=1 // pred_region
      %85 = dma.done [#allocation5], 128
    $region25: #{tpu_custom_call.1} parent=1 // pred_fallthru
      _
    %86 = vsyncpa [#allocation4], 1
    %87 = vsyncpa [#allocation5], 1

</llo_original>
